<compile_context>
chip_gen: v6e
topology: v6e:2x2x1
jax: 0.10.0
libtpu: 0.0.40
codegen_flags: <defaults>
</compile_context>

<pallas_src>
import functools

import jax
import jax.numpy as jnp
from jax import lax
from jax.experimental import pallas as pl
from jax.experimental.pallas import tpu as pltpu

_EPS = 1e-5
_SQRT1_2 = 0.7071067811865476


def _erf(x):
    # Abramowitz & Stegun 7.1.26 rational approximation (|err| <= 1.5e-7);
    # exp/mul/add/where only, so it always lowers on Mosaic; matches the exact
    # erf used by torch.nn.GELU() to ~float32 precision.
    a1, a2, a3, a4, a5 = 0.254829592, -0.284496736, 1.421413741, -1.453152027, 1.061405429
    p = 0.3275911
    ax = jnp.abs(x)
    t = 1.0 / (1.0 + p * ax)
    poly = ((((a5 * t + a4) * t + a3) * t + a2) * t + a1) * t
    y = 1.0 - poly * jnp.exp(-ax * ax)
    return jnp.where(x >= 0.0, y, -y)


def _gelu(x):
    # Exact (erf-based) GELU, like torch.nn.GELU() default.
    return 0.5 * x * (1.0 + _erf(x * _SQRT1_2))


def _group_norm1(y, gamma, beta):
    # GroupNorm(num_groups=1) over one (C, H*W) sample; one-pass sum / sum-sq
    # statistics, biased variance, eps=1e-5, per-channel affine (gamma/beta: (C,1)).
    n = float(y.shape[0] * y.shape[1])
    s = jnp.sum(y)
    sq = jnp.sum(y * y)
    mean = s / n
    var = jnp.maximum(sq / n - mean * mean, 0.0)   # guard against cancellation
    return (y - mean) * lax.rsqrt(var + _EPS) * gamma + beta


def _double_conv_kernel(*refs, H, W, residual):
    if residual:
        (xcol_ref, xres_ref, w1_ref, g1w_ref, g1b_ref,
         w2_ref, g2w_ref, g2b_ref, o_ref) = refs
    else:
        (xcol_ref, w1_ref, g1w_ref, g1b_ref,
         w2_ref, g2w_ref, g2b_ref, o_ref) = refs
        xres_ref = None

    HW = H * W
    xcol = xcol_ref[0]                  # (9*Cin, HW) bf16, wrapper-built im2col
    w1t = w1_ref[...]                   # (Cmid, 9*Cin) bf16
    w2t = w2_ref[...]                   # (Cout, 9*Cmid) bf16
    cmid = w1t.shape[0]

    # ---- conv1: one lane-dense MXU matmul, f32 accumulation
    acc1 = jnp.dot(w1t, xcol, preferred_element_type=jnp.float32)      # (Cmid, HW)

    # ---- GroupNorm(1 group) + exact GELU
    h = _gelu(_group_norm1(acc1, g1w_ref[...], g1b_ref[...]))          # f32 (Cmid, HW)

    # ---- conv2: build the 9 shifted tap planes from the in-register h via
    # lane rolls (XLU) + edge masks, stack along sublanes, one MXU matmul.
    flat = lax.broadcasted_iota(jnp.int32, (cmid, HW), 1)              # flat index p
    if (W & (W - 1)) == 0:
        col = jnp.bitwise_and(flat, W - 1)                             # p % W (pow2)
    else:
        col = flat % W
    planes = []
    for dy in range(3):
        for dx in range(3):
            s = (dy - 1) * W + (dx - 1)          # source offset in flat space
            tap = h if s == 0 else pltpu.roll(h, shift=(-s) % HW, axis=1)
            valid = None
            if dy == 0:
                valid = flat >= W                # y-1 >= 0
            elif dy == 2:
                valid = flat < HW - W            # y+1 <  H
            if dx == 0:
                vx = col >= 1                    # x-1 >= 0
                valid = vx if valid is None else (valid & vx)
            elif dx == 2:
                vx = col < W - 1                 # x+1 <  W
                valid = vx if valid is None else (valid & vx)
            if valid is not None:
                tap = jnp.where(valid, tap, 0.0)
            planes.append(tap)
    patch2 = jnp.concatenate(planes, axis=0).astype(jnp.bfloat16)      # (9*Cmid, HW)

    acc2 = jnp.dot(w2t, patch2, preferred_element_type=jnp.float32)    # (Cout, HW)
    z = _group_norm1(acc2, g2w_ref[...], g2b_ref[...])

    if residual:
        z = _gelu(xres_ref[0] + z)               # Cin == Cout; aligned f32 block

    o_ref[...] = z.reshape(o_ref.shape).astype(o_ref.dtype)


def double_conv(x_nchw, params, residual=False):
    """Pallas DoubleConv forward. x_nchw: (B, Cin, H, W) float32 -> (B, Cout, H, W)."""
    w1, g1w, g1b, w2, g2w, g2b = params          # conv weights in HWIO
    B, Cin, H, W = x_nchw.shape
    Cmid, Cout = w1.shape[3], w2.shape[3]
    HW = H * W
    if residual and Cin != Cout:
        raise ValueError("residual=True requires in_channels == out_channels")

    # im2col for conv1 in the transposed (K, H*W) orientation; bf16 MXU operands.
    xpad = jnp.pad(x_nchw, ((0, 0), (0, 0), (1, 1), (1, 1)))
    taps = [xpad[:, :, dy:dy + H, dx:dx + W].reshape(B, Cin, HW)
            for dy in range(3) for dx in range(3)]
    xcol = jnp.concatenate(taps, axis=1).astype(jnp.bfloat16)          # (B, 9*Cin, HW)

    # 2-D lane-friendly weights: w1t[m, tap*Cin + c] = w1[dy, dx, c, m].
    w1t = jnp.transpose(w1.reshape(9, Cin, Cmid), (2, 0, 1)).reshape(Cmid, 9 * Cin)
    w2t = jnp.transpose(w2.reshape(9, Cmid, Cout), (2, 0, 1)).reshape(Cout, 9 * Cmid)
    w1t = w1t.astype(jnp.bfloat16)
    w2t = w2t.astype(jnp.bfloat16)

    kern = functools.partial(_double_conv_kernel, H=H, W=W, residual=residual)

    in_specs = [pl.BlockSpec((1, 9 * Cin, HW), lambda b: (b, 0, 0))]
    inputs = [xcol]
    if residual:
        # Unpadded residual input as its own aligned block (no offset-1 slicing).
        in_specs.append(pl.BlockSpec((1, Cin, HW), lambda b: (b, 0, 0)))
        inputs.append(x_nchw.reshape(B, Cin, HW))
    in_specs += [
        pl.BlockSpec((Cmid, 9 * Cin), lambda b: (0, 0)),
        pl.BlockSpec((Cmid, 1), lambda b: (0, 0)),
        pl.BlockSpec((Cmid, 1), lambda b: (0, 0)),
        pl.BlockSpec((Cout, 9 * Cmid), lambda b: (0, 0)),
        pl.BlockSpec((Cout, 1), lambda b: (0, 0)),
        pl.BlockSpec((Cout, 1), lambda b: (0, 0)),
    ]
    inputs += [w1t, g1w.reshape(Cmid, 1), g1b.reshape(Cmid, 1),
               w2t, g2w.reshape(Cout, 1), g2b.reshape(Cout, 1)]

    # Scoped VMEM sized to the actual block set (double-buffered blocks, weights,
    # generous headroom for in-kernel temporaries), at least 16 MiB on every chip.
    blk_bytes = (2 * 2 * 9 * Cin * HW                       # xcol, bf16, 2 buffers
                 + (2 * 4 * Cin * HW if residual else 0)    # residual input, f32
                 + 2 * 4 * Cout * HW                        # output block, f32
                 + 2 * 9 * (Cmid * Cin + Cout * Cmid)       # bf16 weights
                 + 4 * 2 * (Cmid + Cout)                    # gamma/beta
                 + 4 * 16 * Cmid * HW)                      # tap planes & temps
    vmem_limit = int(max(16 * 1024 * 1024, 2 * blk_bytes))

    out = pl.pallas_call(
        kern,
        out_shape=jax.ShapeDtypeStruct((B, Cout, HW), x_nchw.dtype),
        grid_spec=pltpu.PrefetchScalarGridSpec(
            num_scalar_prefetch=0,
            grid=(B,),
            in_specs=in_specs,
            out_specs=pl.BlockSpec((1, Cout, HW), lambda b: (b, 0, 0)),
        ),
        compiler_params=pltpu.CompilerParams(
            dimension_semantics=("parallel",),
            vmem_limit_bytes=vmem_limit,
        ),
    )(*inputs)

    return out.reshape(B, Cout, H, W)


def init_params(key, in_channels, out_channels, mid_channels=None):
    """Deterministic parameter init matching the PyTorch module's shapes.
    Conv weights: PyTorch default kaiming-uniform bound 1/sqrt(fan_in), no bias.
    GroupNorm: weight=1, bias=0 (PyTorch defaults)."""
    if not mid_channels:
        mid_channels = out_channels
    k1, k2 = jax.random.split(key)
    b1 = 1.0 / (in_channels * 9) ** 0.5
    b2 = 1.0 / (mid_channels * 9) ** 0.5
    w1 = jax.random.uniform(k1, (3, 3, in_channels, mid_channels),
                            jnp.float32, -b1, b1)          # HWIO
    w2 = jax.random.uniform(k2, (3, 3, mid_channels, out_channels),
                            jnp.float32, -b2, b2)
    g1w = jnp.ones((mid_channels,), jnp.float32)
    g1b = jnp.zeros((mid_channels,), jnp.float32)
    g2w = jnp.ones((out_channels,), jnp.float32)
    g2b = jnp.zeros((out_channels,), jnp.float32)
    return (w1, g1w, g1b, w2, g2w, g2b)


def _ref_double_conv(x_nchw, params, residual=False):
    """Pure-JAX reference (mirrors the PyTorch forward) for correctness check."""
    w1, g1w, g1b, w2, g2w, g2b = params
    x = jnp.transpose(x_nchw, (0, 2, 3, 1))

    def conv(h, w):
        return lax.conv_general_dilated(h, w, (1, 1), 'SAME',
                                        dimension_numbers=('NHWC', 'HWIO', 'NHWC'))

    def gn(h, g, b):
        mean = jnp.mean(h, axis=(1, 2, 3), keepdims=True)
        var = jnp.mean((h - mean) ** 2, axis=(1, 2, 3), keepdims=True)
        return (h - mean) / jnp.sqrt(var + _EPS) * g + b

    h = gn(conv(x, w1), g1w, g1b)
    h = jax.nn.gelu(h, approximate=False)
    h = gn(conv(h, w2), g2w, g2b)
    if residual:
        h = jax.nn.gelu(x + h, approximate=False)
    return jnp.transpose(h, (0, 3, 1, 2))


if __name__ == "__main__":
    key = jax.random.PRNGKey(0)
    kx, kp, kx2, kp2 = jax.random.split(key, 4)

    # Case 1: plain DoubleConv (Cin != Cout).
    B, Cin, Cout, H, W = 2, 4, 8, 16, 16
    x = jax.random.normal(kx, (B, Cin, H, W), jnp.float32)
    params = init_params(kp, Cin, Cout)
    out = jax.block_until_ready(double_conv(x, params, residual=False))
    ref = _ref_double_conv(x, params, residual=False)
    assert out.shape == (B, Cout, H, W)
    # bf16 MXU operands (f32 accumulation) -> not bit-matching the all-f32 reference.
    assert jnp.allclose(out, ref, rtol=2e-2, atol=2e-2), "mismatch (residual=False)"

    # Case 2: residual DoubleConv (requires Cin == Cout).
    C = 8
    x2 = jax.random.normal(kx2, (B, C, H, W), jnp.float32)
    params2 = init_params(kp2, C, C)
    out2 = jax.block_until_ready(double_conv(x2, params2, residual=True))
    ref2 = _ref_double_conv(x2, params2, residual=True)
    assert out2.shape == (B, C, H, W)
    assert jnp.allclose(out2, ref2, rtol=2e-2, atol=2e-2), "mismatch (residual=True)"

    print("KERNEL_OK")
</pallas_src>

<mosaic_0001>
module attributes {stable_mosaic.version = 11 : i64} {
  func.func @_double_conv_kernel(%arg0: i32, %arg1: memref<1x36x256xbf16, #tpu.memory_space<vmem>>, %arg2: memref<8x36xbf16, #tpu.memory_space<vmem>>, %arg3: memref<8x1xf32, #tpu.memory_space<vmem>>, %arg4: memref<8x1xf32, #tpu.memory_space<vmem>>, %arg5: memref<8x72xbf16, #tpu.memory_space<vmem>>, %arg6: memref<8x1xf32, #tpu.memory_space<vmem>>, %arg7: memref<8x1xf32, #tpu.memory_space<vmem>>, %arg8: memref<1x8x256xf32, #tpu.memory_space<vmem>>) attributes {dimension_semantics = [#tpu.dimension_semantics<parallel>], iteration_bounds = array<i64: 2>, scalar_prefetch = 0 : i64, scratch_operands = 0 : i64, tpu.core_type = #tpu.core_type<tc>, window_params = [{transform_indices = @transform_0, window_bounds = array<i64: 1, 36, 256>}, {pipeline_mode = #tpu.pipeline_mode<synchronous>, transform_indices = @transform_1, window_bounds = array<i64: 8, 36>}, {pipeline_mode = #tpu.pipeline_mode<synchronous>, transform_indices = @transform_2, window_bounds = array<i64: 8, 1>}, {pipeline_mode = #tpu.pipeline_mode<synchronous>, transform_indices = @transform_3, window_bounds = array<i64: 8, 1>}, {pipeline_mode = #tpu.pipeline_mode<synchronous>, transform_indices = @transform_4, window_bounds = array<i64: 8, 72>}, {pipeline_mode = #tpu.pipeline_mode<synchronous>, transform_indices = @transform_5, window_bounds = array<i64: 8, 1>}, {pipeline_mode = #tpu.pipeline_mode<synchronous>, transform_indices = @transform_6, window_bounds = array<i64: 8, 1>}, {transform_indices = @transform_7, window_bounds = array<i64: 1, 8, 256>}]} {
    %c0 = arith.constant 0 : index
    %c0_0 = arith.constant 0 : index
    %c0_1 = arith.constant 0 : index
    %0 = vector.load %arg1[%c0, %c0_0, %c0_1] : memref<1x36x256xbf16, #tpu.memory_space<vmem>>, vector<1x36x256xbf16>
    %1 = vector.shape_cast %0 : vector<1x36x256xbf16> to vector<36x256xbf16>
    %c0_2 = arith.constant 0 : index
    %c0_3 = arith.constant 0 : index
    %2 = vector.load %arg2[%c0_2, %c0_3] : memref<8x36xbf16, #tpu.memory_space<vmem>>, vector<8x36xbf16>
    %c0_4 = arith.constant 0 : index
    %c0_5 = arith.constant 0 : index
    %3 = vector.load %arg5[%c0_4, %c0_5] : memref<8x72xbf16, #tpu.memory_space<vmem>>, vector<8x72xbf16>
    %cst = arith.constant dense<0.000000e+00> : vector<8x256xf32>
    %4 = tpu.matmul %2, %1, %cst {dimension_numbers = #tpu.dot_dimension_numbers<[1], [0], [0], [1], [0, 0, 1, 1], [], []>} : vector<8x36xbf16>, vector<36x256xbf16>, vector<8x256xf32> -> vector<8x256xf32>
    %c0_6 = arith.constant 0 : index
    %c0_7 = arith.constant 0 : index
    %5 = vector.load %arg3[%c0_6, %c0_7] : memref<8x1xf32, #tpu.memory_space<vmem>>, vector<8x1xf32>
    %c0_8 = arith.constant 0 : index
    %c0_9 = arith.constant 0 : index
    %6 = vector.load %arg4[%c0_8, %c0_9] : memref<8x1xf32, #tpu.memory_space<vmem>>, vector<8x1xf32>
    %7 = vector.shape_cast %4 : vector<8x256xf32> to vector<1x8x256xf32>
    %cst_10 = arith.constant dense<0.000000e+00> : vector<1xf32>
    %8 = vector.multi_reduction <add>, %7, %cst_10 [1, 2] : vector<1x8x256xf32> to vector<1xf32>
    %9 = vector.shape_cast %8 : vector<1xf32> to vector<1x1x1xf32>
    %10 = vector.extract %9[0, 0, 0] : f32 from vector<1x1x1xf32>
    %11 = arith.mulf %4, %4 : vector<8x256xf32>
    %12 = vector.shape_cast %11 : vector<8x256xf32> to vector<1x8x256xf32>
    %cst_11 = arith.constant dense<0.000000e+00> : vector<1xf32>
    %13 = vector.multi_reduction <add>, %12, %cst_11 [1, 2] : vector<1x8x256xf32> to vector<1xf32>
    %14 = vector.shape_cast %13 : vector<1xf32> to vector<1x1x1xf32>
    %15 = vector.extract %14[0, 0, 0] : f32 from vector<1x1x1xf32>
    %cst_12 = arith.constant 2.048000e+03 : f32
    %16 = arith.divf %10, %cst_12 : f32
    %cst_13 = arith.constant 2.048000e+03 : f32
    %17 = arith.divf %15, %cst_13 : f32
    %18 = arith.mulf %16, %16 : f32
    %19 = arith.subf %17, %18 : f32
    %cst_14 = arith.constant 0.000000e+00 : f32
    %20 = arith.maximumf %19, %cst_14 : f32
    %21 = vector.broadcast %16 : f32 to vector<8x256xf32>
    %22 = arith.subf %4, %21 : vector<8x256xf32>
    %cst_15 = arith.constant 9.99999974E-6 : f32
    %23 = arith.addf %20, %cst_15 : f32
    %24 = math.rsqrt %23 : f32
    %25 = vector.broadcast %24 : f32 to vector<8x256xf32>
    %26 = arith.mulf %22, %25 : vector<8x256xf32>
    %27 = vector.broadcast %5 : vector<8x1xf32> to vector<8x256xf32>
    %28 = arith.mulf %26, %27 : vector<8x256xf32>
    %29 = vector.broadcast %6 : vector<8x1xf32> to vector<8x256xf32>
    %30 = arith.addf %28, %29 : vector<8x256xf32>
    %cst_16 = arith.constant 5.000000e-01 : f32
    %31 = vector.broadcast %cst_16 : f32 to vector<8x256xf32>
    %32 = arith.mulf %31, %30 : vector<8x256xf32>
    %cst_17 = arith.constant 0.707106769 : f32
    %33 = vector.broadcast %cst_17 : f32 to vector<8x256xf32>
    %34 = arith.mulf %30, %33 : vector<8x256xf32>
    %35 = math.absf %34 : vector<8x256xf32>
    %cst_18 = arith.constant 0.327591091 : f32
    %36 = vector.broadcast %cst_18 : f32 to vector<8x256xf32>
    %37 = arith.mulf %36, %35 : vector<8x256xf32>
    %cst_19 = arith.constant 1.000000e+00 : f32
    %38 = vector.broadcast %cst_19 : f32 to vector<8x256xf32>
    %39 = arith.addf %38, %37 : vector<8x256xf32>
    %cst_20 = arith.constant 1.000000e+00 : f32
    %40 = vector.broadcast %cst_20 : f32 to vector<8x256xf32>
    %41 = arith.divf %40, %39 : vector<8x256xf32>
    %cst_21 = arith.constant 1.06140542 : f32
    %42 = vector.broadcast %cst_21 : f32 to vector<8x256xf32>
    %43 = arith.mulf %42, %41 : vector<8x256xf32>
    %cst_22 = arith.constant -1.45315206 : f32
    %44 = vector.broadcast %cst_22 : f32 to vector<8x256xf32>
    %45 = arith.addf %43, %44 : vector<8x256xf32>
    %46 = arith.mulf %45, %41 : vector<8x256xf32>
    %cst_23 = arith.constant 1.42141378 : f32
    %47 = vector.broadcast %cst_23 : f32 to vector<8x256xf32>
    %48 = arith.addf %46, %47 : vector<8x256xf32>
    %49 = arith.mulf %48, %41 : vector<8x256xf32>
    %cst_24 = arith.constant -0.284496725 : f32
    %50 = vector.broadcast %cst_24 : f32 to vector<8x256xf32>
    %51 = arith.addf %49, %50 : vector<8x256xf32>
    %52 = arith.mulf %51, %41 : vector<8x256xf32>
    %cst_25 = arith.constant 0.254829586 : f32
    %53 = vector.broadcast %cst_25 : f32 to vector<8x256xf32>
    %54 = arith.addf %52, %53 : vector<8x256xf32>
    %55 = arith.mulf %54, %41 : vector<8x256xf32>
    %cst_26 = arith.constant 0.000000e+00 : f32
    %56 = vector.broadcast %cst_26 : f32 to vector<8x256xf32>
    %57 = arith.subf %56, %35 : vector<8x256xf32>
    %58 = arith.mulf %57, %35 : vector<8x256xf32>
    %59 = math.exp %58 : vector<8x256xf32>
    %60 = arith.mulf %55, %59 : vector<8x256xf32>
    %cst_27 = arith.constant 1.000000e+00 : f32
    %61 = vector.broadcast %cst_27 : f32 to vector<8x256xf32>
    %62 = arith.subf %61, %60 : vector<8x256xf32>
    %cst_28 = arith.constant 0.000000e+00 : f32
    %63 = vector.broadcast %cst_28 : f32 to vector<8x256xf32>
    %64 = arith.cmpf oge, %34, %63 : vector<8x256xf32>
    %cst_29 = arith.constant 0.000000e+00 : f32
    %65 = vector.broadcast %cst_29 : f32 to vector<8x256xf32>
    %66 = arith.subf %65, %62 : vector<8x256xf32>
    %67 = arith.select %64, %62, %66 : vector<8x256xi1>, vector<8x256xf32>
    %cst_30 = arith.constant 1.000000e+00 : f32
    %68 = vector.broadcast %cst_30 : f32 to vector<8x256xf32>
    %69 = arith.addf %68, %67 : vector<8x256xf32>
    %70 = arith.mulf %32, %69 : vector<8x256xf32>
    %71 = tpu.iota {dimensions = array<i32: 1>} : vector<8x256xi32>
    %c15_i32 = arith.constant 15 : i32
    %72 = vector.broadcast %c15_i32 : i32 to vector<8x256xi32>
    %73 = arith.andi %71, %72 : vector<8x256xi32>
    %c17_i32 = arith.constant 17 : i32
    %74 = tpu.dynamic_rotate %70 by %c17_i32 dim 1 : vector<8x256xf32>, i32 -> vector<8x256xf32>
    %c16_i32 = arith.constant 16 : i32
    %75 = vector.broadcast %c16_i32 : i32 to vector<8x256xi32>
    %76 = arith.cmpi sge, %71, %75 : vector<8x256xi32>
    %c1_i32 = arith.constant 1 : i32
    %77 = vector.broadcast %c1_i32 : i32 to vector<8x256xi32>
    %78 = arith.cmpi sge, %73, %77 : vector<8x256xi32>
    %79 = arith.andi %76, %78 : vector<8x256xi1>
    %cst_31 = arith.constant 0.000000e+00 : f32
    %80 = vector.broadcast %cst_31 : f32 to vector<8x256xf32>
    %81 = arith.select %79, %74, %80 : vector<8x256xi1>, vector<8x256xf32>
    %c16_i32_32 = arith.constant 16 : i32
    %82 = tpu.dynamic_rotate %70 by %c16_i32_32 dim 1 : vector<8x256xf32>, i32 -> vector<8x256xf32>
    %c16_i32_33 = arith.constant 16 : i32
    %83 = vector.broadcast %c16_i32_33 : i32 to vector<8x256xi32>
    %84 = arith.cmpi sge, %71, %83 : vector<8x256xi32>
    %cst_34 = arith.constant 0.000000e+00 : f32
    %85 = vector.broadcast %cst_34 : f32 to vector<8x256xf32>
    %86 = arith.select %84, %82, %85 : vector<8x256xi1>, vector<8x256xf32>
    %c15_i32_35 = arith.constant 15 : i32
    %87 = tpu.dynamic_rotate %70 by %c15_i32_35 dim 1 : vector<8x256xf32>, i32 -> vector<8x256xf32>
    %c16_i32_36 = arith.constant 16 : i32
    %88 = vector.broadcast %c16_i32_36 : i32 to vector<8x256xi32>
    %89 = arith.cmpi sge, %71, %88 : vector<8x256xi32>
    %c15_i32_37 = arith.constant 15 : i32
    %90 = vector.broadcast %c15_i32_37 : i32 to vector<8x256xi32>
    %91 = arith.cmpi slt, %73, %90 : vector<8x256xi32>
    %92 = arith.andi %89, %91 : vector<8x256xi1>
    %cst_38 = arith.constant 0.000000e+00 : f32
    %93 = vector.broadcast %cst_38 : f32 to vector<8x256xf32>
    %94 = arith.select %92, %87, %93 : vector<8x256xi1>, vector<8x256xf32>
    %c1_i32_39 = arith.constant 1 : i32
    %95 = tpu.dynamic_rotate %70 by %c1_i32_39 dim 1 : vector<8x256xf32>, i32 -> vector<8x256xf32>
    %c1_i32_40 = arith.constant 1 : i32
    %96 = vector.broadcast %c1_i32_40 : i32 to vector<8x256xi32>
    %97 = arith.cmpi sge, %73, %96 : vector<8x256xi32>
    %cst_41 = arith.constant 0.000000e+00 : f32
    %98 = vector.broadcast %cst_41 : f32 to vector<8x256xf32>
    %99 = arith.select %97, %95, %98 : vector<8x256xi1>, vector<8x256xf32>
    %c255_i32 = arith.constant 255 : i32
    %100 = tpu.dynamic_rotate %70 by %c255_i32 dim 1 : vector<8x256xf32>, i32 -> vector<8x256xf32>
    %c15_i32_42 = arith.constant 15 : i32
    %101 = vector.broadcast %c15_i32_42 : i32 to vector<8x256xi32>
    %102 = arith.cmpi slt, %73, %101 : vector<8x256xi32>
    %cst_43 = arith.constant 0.000000e+00 : f32
    %103 = vector.broadcast %cst_43 : f32 to vector<8x256xf32>
    %104 = arith.select %102, %100, %103 : vector<8x256xi1>, vector<8x256xf32>
    %c241_i32 = arith.constant 241 : i32
    %105 = tpu.dynamic_rotate %70 by %c241_i32 dim 1 : vector<8x256xf32>, i32 -> vector<8x256xf32>
    %c240_i32 = arith.constant 240 : i32
    %106 = vector.broadcast %c240_i32 : i32 to vector<8x256xi32>
    %107 = arith.cmpi slt, %71, %106 : vector<8x256xi32>
    %c1_i32_44 = arith.constant 1 : i32
    %108 = vector.broadcast %c1_i32_44 : i32 to vector<8x256xi32>
    %109 = arith.cmpi sge, %73, %108 : vector<8x256xi32>
    %110 = arith.andi %107, %109 : vector<8x256xi1>
    %cst_45 = arith.constant 0.000000e+00 : f32
    %111 = vector.broadcast %cst_45 : f32 to vector<8x256xf32>
    %112 = arith.select %110, %105, %111 : vector<8x256xi1>, vector<8x256xf32>
    %c240_i32_46 = arith.constant 240 : i32
    %113 = tpu.dynamic_rotate %70 by %c240_i32_46 dim 1 : vector<8x256xf32>, i32 -> vector<8x256xf32>
    %c240_i32_47 = arith.constant 240 : i32
    %114 = vector.broadcast %c240_i32_47 : i32 to vector<8x256xi32>
    %115 = arith.cmpi slt, %71, %114 : vector<8x256xi32>
    %cst_48 = arith.constant 0.000000e+00 : f32
    %116 = vector.broadcast %cst_48 : f32 to vector<8x256xf32>
    %117 = arith.select %115, %113, %116 : vector<8x256xi1>, vector<8x256xf32>
    %c239_i32 = arith.constant 239 : i32
    %118 = tpu.dynamic_rotate %70 by %c239_i32 dim 1 : vector<8x256xf32>, i32 -> vector<8x256xf32>
    %c240_i32_49 = arith.constant 240 : i32
    %119 = vector.broadcast %c240_i32_49 : i32 to vector<8x256xi32>
    %120 = arith.cmpi slt, %71, %119 : vector<8x256xi32>
    %c15_i32_50 = arith.constant 15 : i32
    %121 = vector.broadcast %c15_i32_50 : i32 to vector<8x256xi32>
    %122 = arith.cmpi slt, %73, %121 : vector<8x256xi32>
    %123 = arith.andi %120, %122 : vector<8x256xi1>
    %cst_51 = arith.constant 0.000000e+00 : f32
    %124 = vector.broadcast %cst_51 : f32 to vector<8x256xf32>
    %125 = arith.select %123, %118, %124 : vector<8x256xi1>, vector<8x256xf32>
    %126 = tpu.concatenate %81, %86, %94, %99, %70, %104, %112, %117, %125 in 0 : vector<8x256xf32>, vector<8x256xf32>, vector<8x256xf32>, vector<8x256xf32>, vector<8x256xf32>, vector<8x256xf32>, vector<8x256xf32>, vector<8x256xf32>, vector<8x256xf32> -> vector<72x256xf32>
    %127 = arith.truncf %126 : vector<72x256xf32> to vector<72x256xbf16>
    %cst_52 = arith.constant dense<0.000000e+00> : vector<8x256xf32>
    %128 = tpu.matmul %3, %127, %cst_52 {dimension_numbers = #tpu.dot_dimension_numbers<[1], [0], [0], [1], [0, 0, 1, 1], [], []>} : vector<8x72xbf16>, vector<72x256xbf16>, vector<8x256xf32> -> vector<8x256xf32>
    %c0_53 = arith.constant 0 : index
    %c0_54 = arith.constant 0 : index
    %129 = vector.load %arg6[%c0_53, %c0_54] : memref<8x1xf32, #tpu.memory_space<vmem>>, vector<8x1xf32>
    %c0_55 = arith.constant 0 : index
    %c0_56 = arith.constant 0 : index
    %130 = vector.load %arg7[%c0_55, %c0_56] : memref<8x1xf32, #tpu.memory_space<vmem>>, vector<8x1xf32>
    %131 = vector.shape_cast %128 : vector<8x256xf32> to vector<1x8x256xf32>
    %cst_57 = arith.constant dense<0.000000e+00> : vector<1xf32>
    %132 = vector.multi_reduction <add>, %131, %cst_57 [1, 2] : vector<1x8x256xf32> to vector<1xf32>
    %133 = vector.shape_cast %132 : vector<1xf32> to vector<1x1x1xf32>
    %134 = vector.extract %133[0, 0, 0] : f32 from vector<1x1x1xf32>
    %135 = arith.mulf %128, %128 : vector<8x256xf32>
    %136 = vector.shape_cast %135 : vector<8x256xf32> to vector<1x8x256xf32>
    %cst_58 = arith.constant dense<0.000000e+00> : vector<1xf32>
    %137 = vector.multi_reduction <add>, %136, %cst_58 [1, 2] : vector<1x8x256xf32> to vector<1xf32>
    %138 = vector.shape_cast %137 : vector<1xf32> to vector<1x1x1xf32>
    %139 = vector.extract %138[0, 0, 0] : f32 from vector<1x1x1xf32>
    %cst_59 = arith.constant 2.048000e+03 : f32
    %140 = arith.divf %134, %cst_59 : f32
    %cst_60 = arith.constant 2.048000e+03 : f32
    %141 = arith.divf %139, %cst_60 : f32
    %142 = arith.mulf %140, %140 : f32
    %143 = arith.subf %141, %142 : f32
    %cst_61 = arith.constant 0.000000e+00 : f32
    %144 = arith.maximumf %143, %cst_61 : f32
    %145 = vector.broadcast %140 : f32 to vector<8x256xf32>
    %146 = arith.subf %128, %145 : vector<8x256xf32>
    %cst_62 = arith.constant 9.99999974E-6 : f32
    %147 = arith.addf %144, %cst_62 : f32
    %148 = math.rsqrt %147 : f32
    %149 = vector.broadcast %148 : f32 to vector<8x256xf32>
    %150 = arith.mulf %146, %149 : vector<8x256xf32>
    %151 = vector.broadcast %129 : vector<8x1xf32> to vector<8x256xf32>
    %152 = arith.mulf %150, %151 : vector<8x256xf32>
    %153 = vector.broadcast %130 : vector<8x1xf32> to vector<8x256xf32>
    %154 = arith.addf %152, %153 : vector<8x256xf32>
    %155 = vector.shape_cast %154 : vector<8x256xf32> to vector<1x8x256xf32>
    %c0_63 = arith.constant 0 : index
    %c0_64 = arith.constant 0 : index
    %c0_65 = arith.constant 0 : index
    %156 = vector.load %arg8[%c0_63, %c0_64, %c0_65] : memref<1x8x256xf32, #tpu.memory_space<vmem>>, vector<1x8x256xf32>
    tpu.vector_store %arg8[%c0_63, %c0_64, %c0_65], %155 {strides = array<i32>} : memref<1x8x256xf32, #tpu.memory_space<vmem>>, vector<1x8x256xf32>,
    return
  }
  func.func @transform_0(%arg0: i32) -> (i32, i32, i32) {
    %c0_i32 = arith.constant 0 : i32
    %c0_i32_0 = arith.constant 0 : i32
    %c0_i32_1 = arith.constant 0 : i32
    return %arg0, %c0_i32, %c0_i32_0 : i32, i32, i32
  }
  func.func @transform_1(%arg0: i32) -> (i32, i32) {
    %c0_i32 = arith.constant 0 : i32
    %c0_i32_0 = arith.constant 0 : i32
    %c0_i32_1 = arith.constant 0 : i32
    return %c0_i32, %c0_i32_0 : i32, i32
  }
  func.func @transform_2(%arg0: i32) -> (i32, i32) {
    %c0_i32 = arith.constant 0 : i32
    %c0_i32_0 = arith.constant 0 : i32
    %c0_i32_1 = arith.constant 0 : i32
    return %c0_i32, %c0_i32_0 : i32, i32
  }
  func.func @transform_3(%arg0: i32) -> (i32, i32) {
    %c0_i32 = arith.constant 0 : i32
    %c0_i32_0 = arith.constant 0 : i32
    %c0_i32_1 = arith.constant 0 : i32
    return %c0_i32, %c0_i32_0 : i32, i32
  }
  func.func @transform_4(%arg0: i32) -> (i32, i32) {
    %c0_i32 = arith.constant 0 : i32
    %c0_i32_0 = arith.constant 0 : i32
    %c0_i32_1 = arith.constant 0 : i32
    return %c0_i32, %c0_i32_0 : i32, i32
  }
  func.func @transform_5(%arg0: i32) -> (i32, i32) {
    %c0_i32 = arith.constant 0 : i32
    %c0_i32_0 = arith.constant 0 : i32
    %c0_i32_1 = arith.constant 0 : i32
    return %c0_i32, %c0_i32_0 : i32, i32
  }
  func.func @transform_6(%arg0: i32) -> (i32, i32) {
    %c0_i32 = arith.constant 0 : i32
    %c0_i32_0 = arith.constant 0 : i32
    %c0_i32_1 = arith.constant 0 : i32
    return %c0_i32, %c0_i32_0 : i32, i32
  }
  func.func @transform_7(%arg0: i32) -> (i32, i32, i32) {
    %c0_i32 = arith.constant 0 : i32
    %c0_i32_0 = arith.constant 0 : i32
    %c0_i32_1 = arith.constant 0 : i32
    return %arg0, %c0_i32, %c0_i32_0 : i32, i32, i32
  }
}

</mosaic_0001>

<llo_original>
// kernel: tpu_custom_call.1
$region0: #{tpu_custom_call.1}
  #allocation0 [shape = 'u32[]', space=smem, size = 0x4, offset = 0x4, fixed_abs, tag = 'smem constant byte address 0x4 - core index']
  #allocation1 [shape = 'u32[144,128]{1,0:T(1,128)}', space=vmem, size = 0x12000, scoped, tag = 'internal scratch']
  %s0 = inlined_call_operand.vmem [shape: bf16[2,36,256], index: 0, kind: input, shape index: {}]
  %s1 = inlined_call_operand.vmem [shape: bf16[8,36], index: 1, kind: input, shape index: {}]
  %s2 = inlined_call_operand.vmem [shape: f32[8,1], index: 2, kind: input, shape index: {}]
  %s3 = inlined_call_operand.vmem [shape: f32[8,1], index: 3, kind: input, shape index: {}]
  %s4 = inlined_call_operand.vmem [shape: bf16[8,72], index: 4, kind: input, shape index: {}]
  %s5 = inlined_call_operand.vmem [shape: f32[8,1], index: 5, kind: input, shape index: {}]
  %s6 = inlined_call_operand.vmem [shape: f32[8,1], index: 6, kind: input, shape index: {}]
  %s7 = inlined_call_operand.hbm [shape: f32[2,8,256], index: 7, kind: output, shape index: {}]
  %s8 = sld [smem:[#allocation0]]
  $region61: #{tpu_custom_call.1} parent=0
    _
  %s10 = ssub.s32 1, %s8
  %s11 = scalar_select 0, %s10, %s8
  $region1: #{tpu_custom_call.1} parent=0
    #allocation2 [shape = 'u8[16384]{0}', space=vmem, size = 0x4000, scoped, tag = 'output window, operand 0']
    #allocation3 [shape = 's32[2]{0}', space=sflag, size = 0x8, scoped, tag = 'scoped memory for tpu_custom_call.1']
    %12 = vsyncpa [#allocation3], 0
    %s13 = scalar_lea.sflag [#allocation3], 1
    %14 = vsyncpa %s13, 0
    loop: start=0, step=1, limit=4
    $region2: #{tpu_custom_call.1} parent=1 // loop_pre_header
      _
    $region3: #{tpu_custom_call.1} parent=1 // loop_header
      %s16 = sphi 0, %s20
      %p17 = scmp.ge.s32.totalorder %s16, 4
      %s26 = sphi 0, %s28
      %s29 = sphi 0, %s26
      %s30 = sphi 0, %s29
      %s46 = sphi 0, %s30
      %s50 = sphi 0, %s50
      %s52 = sphi 0, %s50
      %s53 = sphi 0, %s52
      %s67 = sphi 0, %s53
      %s71 = sphi 0, %s71
      %s73 = sphi 0, %s71
      %s74 = sphi 0, %s73
      %s88 = sphi 0, %s74
      %s92 = sphi 0, %s92
      %s94 = sphi 0, %s92
      %s95 = sphi 0, %s94
      %s109 = sphi 0, %s95
      %s113 = sphi 0, %s113
      %s115 = sphi 0, %s113
      %s116 = sphi 0, %s115
      %s130 = sphi 0, %s116
      %s134 = sphi 0, %s134
      %s136 = sphi 0, %s134
      %s137 = sphi 0, %s136
      %s151 = sphi 0, %s137
      %s155 = sphi 0, %s155
      %s157 = sphi 0, %s155
      %s158 = sphi 0, %s157
      %s172 = sphi 0, %s158
      %s178 = sphi 0, %s180
      %s181 = sphi 0, %s178
      %s182 = sphi 0, %s181
      %s198 = sphi 0, %s182
    $region4: #{tpu_custom_call.1} parent=1 // loop_header_branch
      %19 = sbr.rel (%p17) target = $region8
    $region5: #{tpu_custom_call.1} parent=1 // loop_body
      %s21 = ssub.s32 %s16, 1
      %s22 = ssub.s32 %s16, 2
      %s23 = sadd.s32 %s16, 1
      %s24 = ssub.s32 %s16, %s23
      %p25 = scmp.eq.s32.totalorder %s24, 0
      %s27 = sadd.s32 %s26, 1
      %s28 = scalar_select %p25, %s26, %s27
      %p31 = pneg %p25
      %p32 = scmp.eq.s32.totalorder %s16, 1
      %p33 = por %p31, %p32
      %p34 = scmp.ne.s32.totalorder %s26, %s29
      %p35 = scmp.eq.s32.totalorder %s16, 0
      %p36 = por %p34, %p35
      %p37 = scmp.ne.s32.totalorder %s26, %s29
      %p38 = scmp.eq.s32.totalorder %s21, 1
      %p39 = por %p37, %p38
      %p40 = scmp.ne.s32.totalorder %s29, %s30
      %p41 = scmp.eq.s32.totalorder %s21, 0
      %p42 = por %p40, %p41
      %p43 = scmp.ne.s32.totalorder %s29, %s30
      %p44 = scmp.eq.s32.totalorder %s22, 1
      %p45 = por %p43, %p44
      %p47 = scmp.ne.s32.totalorder %s30, %s46
      %p48 = scmp.eq.s32.totalorder %s22, 0
      %p49 = por %p47, %p48
      %s51 = sadd.s32 %s50, 1
      %p54 = scmp.eq.s32.totalorder %s16, 1
      %p55 = scmp.ne.s32.totalorder %s50, %s52
      %p56 = scmp.eq.s32.totalorder %s16, 0
      %p57 = por %p55, %p56
      %p58 = scmp.ne.s32.totalorder %s50, %s52
      %p59 = scmp.eq.s32.totalorder %s21, 1
      %p60 = por %p58, %p59
      %p61 = scmp.ne.s32.totalorder %s52, %s53
      %p62 = scmp.eq.s32.totalorder %s21, 0
      %p63 = por %p61, %p62
      %p64 = scmp.ne.s32.totalorder %s52, %s53
      %p65 = scmp.eq.s32.totalorder %s22, 1
      %p66 = por %p64, %p65
      %p68 = scmp.ne.s32.totalorder %s53, %s67
      %p69 = scmp.eq.s32.totalorder %s22, 0
      %p70 = por %p68, %p69
      %s72 = sadd.s32 %s71, 1
      %p75 = scmp.eq.s32.totalorder %s16, 1
      %p76 = scmp.ne.s32.totalorder %s71, %s73
      %p77 = scmp.eq.s32.totalorder %s16, 0
      %p78 = por %p76, %p77
      %p79 = scmp.ne.s32.totalorder %s71, %s73
      %p80 = scmp.eq.s32.totalorder %s21, 1
      %p81 = por %p79, %p80
      %p82 = scmp.ne.s32.totalorder %s73, %s74
      %p83 = scmp.eq.s32.totalorder %s21, 0
      %p84 = por %p82, %p83
      %p85 = scmp.ne.s32.totalorder %s73, %s74
      %p86 = scmp.eq.s32.totalorder %s22, 1
      %p87 = por %p85, %p86
      %p89 = scmp.ne.s32.totalorder %s74, %s88
      %p90 = scmp.eq.s32.totalorder %s22, 0
      %p91 = por %p89, %p90
      %s93 = sadd.s32 %s92, 1
      %p96 = scmp.eq.s32.totalorder %s16, 1
      %p97 = scmp.ne.s32.totalorder %s92, %s94
      %p98 = scmp.eq.s32.totalorder %s16, 0
      %p99 = por %p97, %p98
      %p100 = scmp.ne.s32.totalorder %s92, %s94
      %p101 = scmp.eq.s32.totalorder %s21, 1
      %p102 = por %p100, %p101
      %p103 = scmp.ne.s32.totalorder %s94, %s95
      %p104 = scmp.eq.s32.totalorder %s21, 0
      %p105 = por %p103, %p104
      %p106 = scmp.ne.s32.totalorder %s94, %s95
      %p107 = scmp.eq.s32.totalorder %s22, 1
      %p108 = por %p106, %p107
      %p110 = scmp.ne.s32.totalorder %s95, %s109
      %p111 = scmp.eq.s32.totalorder %s22, 0
      %p112 = por %p110, %p111
      %s114 = sadd.s32 %s113, 1
      %p117 = scmp.eq.s32.totalorder %s16, 1
      %p118 = scmp.ne.s32.totalorder %s113, %s115
      %p119 = scmp.eq.s32.totalorder %s16, 0
      %p120 = por %p118, %p119
      %p121 = scmp.ne.s32.totalorder %s113, %s115
      %p122 = scmp.eq.s32.totalorder %s21, 1
      %p123 = por %p121, %p122
      %p124 = scmp.ne.s32.totalorder %s115, %s116
      %p125 = scmp.eq.s32.totalorder %s21, 0
      %p126 = por %p124, %p125
      %p127 = scmp.ne.s32.totalorder %s115, %s116
      %p128 = scmp.eq.s32.totalorder %s22, 1
      %p129 = por %p127, %p128
      %p131 = scmp.ne.s32.totalorder %s116, %s130
      %p132 = scmp.eq.s32.totalorder %s22, 0
      %p133 = por %p131, %p132
      %s135 = sadd.s32 %s134, 1
      %p138 = scmp.eq.s32.totalorder %s16, 1
      %p139 = scmp.ne.s32.totalorder %s134, %s136
      %p140 = scmp.eq.s32.totalorder %s16, 0
      %p141 = por %p139, %p140
      %p142 = scmp.ne.s32.totalorder %s134, %s136
      %p143 = scmp.eq.s32.totalorder %s21, 1
      %p144 = por %p142, %p143
      %p145 = scmp.ne.s32.totalorder %s136, %s137
      %p146 = scmp.eq.s32.totalorder %s21, 0
      %p147 = por %p145, %p146
      %p148 = scmp.ne.s32.totalorder %s136, %s137
      %p149 = scmp.eq.s32.totalorder %s22, 1
      %p150 = por %p148, %p149
      %p152 = scmp.ne.s32.totalorder %s137, %s151
      %p153 = scmp.eq.s32.totalorder %s22, 0
      %p154 = por %p152, %p153
      %s156 = sadd.s32 %s155, 1
      %p159 = scmp.eq.s32.totalorder %s16, 1
      %p160 = scmp.ne.s32.totalorder %s155, %s157
      %p161 = scmp.eq.s32.totalorder %s16, 0
      %p162 = por %p160, %p161
      %p163 = scmp.ne.s32.totalorder %s155, %s157
      %p164 = scmp.eq.s32.totalorder %s21, 1
      %p165 = por %p163, %p164
      %p166 = scmp.ne.s32.totalorder %s157, %s158
      %p167 = scmp.eq.s32.totalorder %s21, 0
      %p168 = por %p166, %p167
      %p169 = scmp.ne.s32.totalorder %s157, %s158
      %p170 = scmp.eq.s32.totalorder %s22, 1
      %p171 = por %p169, %p170
      %p173 = scmp.ne.s32.totalorder %s158, %s172
      %p174 = scmp.eq.s32.totalorder %s22, 0
      %p175 = por %p173, %p174
      %s176 = ssub.s32 %s16, %s23
      %p177 = scmp.eq.s32.totalorder %s176, 0
      %s179 = sadd.s32 %s178, 1
      %s180 = scalar_select %p177, %s178, %s179
      %p183 = pneg %p177
      %p184 = scmp.eq.s32.totalorder %s16, 1
      %p185 = por %p183, %p184
      %p186 = scmp.ne.s32.totalorder %s178, %s181
      %p187 = scmp.eq.s32.totalorder %s16, 0
      %p188 = por %p186, %p187
      %p189 = scmp.ne.s32.totalorder %s178, %s181
      %p190 = scmp.eq.s32.totalorder %s21, 1
      %p191 = por %p189, %p190
      %p192 = scmp.ne.s32.totalorder %s181, %s182
      %p193 = scmp.eq.s32.totalorder %s21, 0
      %p194 = por %p192, %p193
      %p195 = scmp.ne.s32.totalorder %s181, %s182
      %p196 = scmp.eq.s32.totalorder %s22, 1
      %p197 = por %p195, %p196
      %p199 = scmp.ne.s32.totalorder %s182, %s198
      %p200 = scmp.eq.s32.totalorder %s22, 0
      %p201 = por %p199, %p200
      %p202 = scmp.le.s32.totalorder 1, %s16
      %p203 = scmp.lt.s32.totalorder %s16, 3
      %p204 = pnand %p202, %p203
      %p205 = pneg %p204
      // Predicated region
      $region9: #{tpu_custom_call.1} parent=5 // pred_check
        _
      $region10: #{tpu_custom_call.1} parent=5 // pred_check_branch
        %207 = sbr.rel (%p204) target = $region12
      $region11: #{tpu_custom_call.1} parent=5 // pred_region
        %s208 = ssub.s32 %s16, 1
        // Predicated region
        $region13: #{tpu_custom_call.1} parent=11 // pred_check
          %p209 = pneg %p63
        $region14: #{tpu_custom_call.1} parent=11 // pred_check_branch
          %211 = sbr.rel (%p209) target = $region16
        $region15: #{tpu_custom_call.1} parent=11 // pred_region
          _
        $region16: #{tpu_custom_call.1} parent=11 // pred_fallthru
          _
        // Predicated region
        $region17: #{tpu_custom_call.1} parent=11 // pred_check
          %p212 = pneg %p84
        $region18: #{tpu_custom_call.1} parent=11 // pred_check_branch
          %214 = sbr.rel (%p212) target = $region20
        $region19: #{tpu_custom_call.1} parent=11 // pred_region
          _
        $region20: #{tpu_custom_call.1} parent=11 // pred_fallthru
          _
        // Predicated region
        $region21: #{tpu_custom_call.1} parent=11 // pred_check
          %p215 = pneg %p105
        $region22: #{tpu_custom_call.1} parent=11 // pred_check_branch
          %217 = sbr.rel (%p215) target = $region24
        $region23: #{tpu_custom_call.1} parent=11 // pred_region
          _
        $region24: #{tpu_custom_call.1} parent=11 // pred_fallthru
          _
        // Predicated region
        $region25: #{tpu_custom_call.1} parent=11 // pred_check
          %p218 = pneg %p126
        $region26: #{tpu_custom_call.1} parent=11 // pred_check_branch
          %220 = sbr.rel (%p218) target = $region28
        $region27: #{tpu_custom_call.1} parent=11 // pred_region
          _
        $region28: #{tpu_custom_call.1} parent=11 // pred_fallthru
          _
        // Predicated region
        $region29: #{tpu_custom_call.1} parent=11 // pred_check
          %p221 = pneg %p147
        $region30: #{tpu_custom_call.1} parent=11 // pred_check_branch
          %223 = sbr.rel (%p221) target = $region32
        $region31: #{tpu_custom_call.1} parent=11 // pred_region
          _
        $region32: #{tpu_custom_call.1} parent=11 // pred_fallthru
          _
        // Predicated region
        $region33: #{tpu_custom_call.1} parent=11 // pred_check
          %p224 = pneg %p168
        $region34: #{tpu_custom_call.1} parent=11 // pred_check_branch
          %226 = sbr.rel (%p224) target = $region36
        $region35: #{tpu_custom_call.1} parent=11 // pred_region
          _
        $region36: #{tpu_custom_call.1} parent=11 // pred_fallthru
          _
      $region12: #{tpu_custom_call.1} parent=5 // pred_fallthru
        _
      %p227 = scmp.lt.s32.totalorder %s16, 2
      // Predicated region
      $region37: #{tpu_custom_call.1} parent=5 // pred_check
        %p228 = pneg %p227
      $region38: #{tpu_custom_call.1} parent=5 // pred_check_branch
        %230 = sbr.rel (%p228) target = $region40
      $region39: #{tpu_custom_call.1} parent=5 // pred_region
        // Predicated region
        $region41: #{tpu_custom_call.1} parent=39 // pred_check
          %p231 = pneg %p36
        $region42: #{tpu_custom_call.1} parent=39 // pred_check_branch
          %233 = sbr.rel (%p231) target = $region44
        $region43: #{tpu_custom_call.1} parent=39 // pred_region
          %p234 = scmp.lt.s32.totalorder %s16, 1
          %s235 = scalar_select %p234, %s16, 1
          %s236 = smul.addr %s235, 10
          %s237 = smul.addr %s236, 4
          %s238 = scalar_lea.vmem %s0, %s237
        $region44: #{tpu_custom_call.1} parent=39 // pred_fallthru
          _
      $region40: #{tpu_custom_call.1} parent=5 // pred_fallthru
        _
      %p239 = scmp.le.s32.totalorder 1, %s16
      %p240 = scmp.lt.s32.totalorder %s16, 3
      %p241 = pnand %p239, %p240
      %p242 = pneg %p241
      // Predicated region
      $region45: #{tpu_custom_call.1} parent=5 // pred_check
        _
      $region46: #{tpu_custom_call.1} parent=5 // pred_check_branch
        %244 = sbr.rel (%p241) target = $region48
      $region47: #{tpu_custom_call.1} parent=5 // pred_region
        %s245 = ssub.s32 %s16, 1
        %p246 = scmp.lt.s32.totalorder %s21, 1
        %s247 = scalar_select %p246, %s21, 1
        %s248 = smul.addr %s247, 10
        %s249 = smul.addr %s248, 4
        %s250 = scalar_lea.vmem %s0, %s249
        %p251 = pneg %p42
        %p252 = pneg %p39
        %p253 = pneg %p63
        %p254 = pneg %p60
        %p255 = pneg %p84
        %p256 = pneg %p81
        %p257 = pneg %p105
        %p258 = pneg %p102
        %p259 = pneg %p126
        %p260 = pneg %p123
        %p261 = pneg %p147
        %p262 = pneg %p144
        %p263 = pneg %p168
        %p264 = pneg %p165
        %p265 = pneg %p194
        %p266 = pneg %p191
        %s267 = sand.u32 %s181, 1
        %s268 = scalar_lea.sflag [#allocation3], %s267
        %s269 = sand.u32 %s181, 1
        %s270 = smul.addr %s269, 16
        %s271 = scalar_lea.vmem [#allocation2], %s270
        %p272 = scmp.lt.s32.totalorder %s21, 1
        %s273 = scalar_select %p272, %s21, 1
        %s274 = smul.addr %s273, 10
        %s275 = smul.addr %s274, 4
        %s276 = scalar_lea.vmem %s0, %s275
        %v278 = vld [vmem:[%s276] sm:$0xff]
        %v279 = vld [vmem:[%s276 + $0x8] sm:$0xff]
        %v280 = vld [vmem:[%s276 + $0x10] sm:$0xff]
        %v281 = vld [vmem:[%s276 + $0x18] sm:$0xff]
        %v282 = vld [vmem:[%s276 + $0x20] sm:$0x33]
        %v283 = vld [vmem:[%s1] sm:$0xf]
        %v284 = vld [vmem:[%s4] sm:$0xf]
        %v290 = vunpack.c.l.b16 %v278
        %v291 = vunpack.c.h.b16 %v278
        %v292 = vunpack.c.l.b16 %v279
        %v293 = vunpack.c.h.b16 %v279
        %v294 = vunpack.c.l.b16 %v280
        %v295 = vunpack.c.h.b16 %v280
        %v296 = vunpack.c.l.b16 %v281
        %v297 = vunpack.c.h.b16 %v281
        %v298 = vunpack.c.l.b16 %v282
        %v299 = vunpack.c.h.b16 %v282
        %v300 = vpack.c.b16 %v292, %v290
        %v301 = vpack.c.b16 %v293, %v291
        %v302 = vpack.c.b16 %v296, %v294
        %v303 = vpack.c.b16 %v297, %v295
        %v304 = vpack.c.b16 %v298, %v298
        %v305 = vpack.c.b16 %v299, %v299
        %vm310 = vcmask 293888
        %v312 = vsel %vm310, %v283, 0
        %vm314 = vcmask 1041408
        %v316 = vsel %vm314, %v304, 0
        %v319 = vsel %vm314, %v305, 0
        %321 = vmatprep.subr.bf16.mxu0 0
        %322 = vmatpush1.bf16.msra.mxu0 0
        %323 = vmatprep.subr.bf16.mxu0 0
        %324 = vmatpush1.bf16.msra.mxu0 0
        %325 = vmatprep.subr.bf16.mxu0 0
        %326 = vmatpush1.bf16.msra.mxu0 0
        %327 = vmatprep.subr.bf16.mxu0 0
        %328 = vmatpush1.bf16.msra.mxu0 0
        %329 = vmatprep.subr.bf16.mxu0 0
        %330 = vmatpush1.bf16.msra.mxu0 0
        %331 = vmatprep.subr.bf16.mxu0 %v319
        %332 = vmatpush1.bf16.msra.mxu0 %v316
        %333 = vmatprep.subr.bf16.mxu0 %v303
        %334 = vmatpush1.bf16.msra.mxu0 %v302
        %335 = vmatprep.subr.bf16.mxu0 %v301
        %336 = vmatpush1.bf16.msra.mxu0 %v300
        %337 = vmatprep.subr.bf16.mxu0 0
        %338 = vmatpush2.bf16.msra.mxu0 0
        %339 = vmatprep.subr.bf16.mxu0 0
        %340 = vmatpush2.bf16.msra.mxu0 0
        %341 = vmatprep.subr.bf16.mxu0 0
        %342 = vmatpush2.bf16.msra.mxu0 0
        %343 = vmatprep.subr.bf16.mxu0 0
        %344 = vmatpush2.bf16.msra.mxu0 0
        %345 = vmatprep.subr.bf16.mxu0 0
        %346 = vmatpush2.bf16.msra.mxu0 0
        %347 = vmatprep.subr.bf16.mxu0 0
        %348 = vmatpush2.bf16.msra.mxu0 0
        %349 = vmatprep.subr.bf16.mxu0 0
        %350 = vmatpush2.bf16.msra.mxu0 0
        %351 = vmatprep.subr.bf16.mxu0 0
        %352 = vmatpush2.bf16.msra.mxu0 0
        %353 = vmatprep.mubr.bf16.mxu0 0
        %354 = vmatmul.mubr.bf16.gmra.mxu0 %v312
        %v355 = vpop.f32.mrf.mxu0
        %v356 = vadd.f32 0.0, %v355
        %v357 = vpop.f32.mrf.mxu0
        %v358 = vadd.f32 0.0, %v357
        %v359 = vpop.f32.mrf.mxu0
        %v360 = vpop.f32.mrf.mxu0
        %361 = vdwg.mxu0
        %v362 = vld [vmem:[%s2] sm:$0xff]
        %v363 = vld [vmem:[%s3] sm:$0xff]
        %v364 = vadd.f32 %v356, %v358
        %365 = vadd.xlane.f32.xlu0 %v364
        %v366 = vpop.xlane.xlu0 %365
        %v367 = vrot.slane %v366, 4
        %v368 = vadd.f32 %v366, %v367
        %v369 = vrot.slane %v368, 2
        %v370 = vadd.f32 %v368, %v369
        %v371 = vrot.slane %v370, 1
        %v372 = vadd.f32 %v370, %v371
        %s373 = vtos %v372
        %v374 = vmul.f32 %v356, %v356
        %v375 = vmul.f32 %v358, %v358
        %v376 = vadd.f32 %v374, %v375
        %377 = vadd.xlane.f32.xlu0 %v376
        %v378 = vpop.xlane.xlu0 %377
        %v379 = vrot.slane %v378, 4
        %v380 = vadd.f32 %v378, %v379
        %v381 = vrot.slane %v380, 2
        %v382 = vadd.f32 %v380, %v381
        %v383 = vrot.slane %v382, 1
        %v384 = vadd.f32 %v382, %v383
        %s385 = vtos %v384
        %v386 = vrcp.pop 2048.0
        %s387 = vtos %v386
        %s388 = smul.f32 %s373, %s387
        %v389 = vrcp.pop 2048.0
        %s390 = vtos %v389
        %s391 = smul.f32 %s385, %s390
        %s392 = smul.f32 %s388, %s388
        %s393 = ssub.f32 %s391, %s392
        %s394 = smax.f32 %s393, 0.0
        %v395 = vstv %s388
        %v396 = vsub.f32 %v356, %v395
        %v397 = vsub.f32 %v358, %v395
        %s398 = sadd.f32 %s394, 1e-05
        %v399 = vstv %s398
        %v400 = vrsqrt.pop %v399
        %s401 = vtos %v400
        %v402 = vstv %s401
        %v403 = vmul.f32 %v396, %v402
        %v404 = vmul.f32 %v397, %v402
        %406 = vset.pattern.permute.xlu0 0
        %407 = vperm.xlu0 %406, %v362
        %v408 = vpop.permute.xlu0 %407
        %v410 = vmul.f32 %v403, %v408
        %v411 = vmul.f32 %v404, %v408
        %413 = vset.pattern.permute.xlu0 0
        %414 = vperm.xlu0 %413, %v363
        %v415 = vpop.permute.xlu0 %414
        %v417 = vadd.f32 %v410, %v415
        %v418 = vadd.f32 %v411, %v415
        %v419 = vmul.f32 %v417, 0.5
        %v420 = vmul.f32 %v418, 0.5
        %v421 = vmul.f32 %v417, 0.70710677
        %v422 = vmul.f32 %v418, 0.70710677
        %v423 = vand.u32 2147483647, %v421
        %v424 = vand.u32 2147483647, %v422
        %v425 = vmul.f32 %v423, 0.3275911
        %v426 = vmul.f32 %v424, 0.3275911
        %v427 = vadd.f32 %v425, 1.0
        %v428 = vadd.f32 %v426, 1.0
        %v429 = vrcp.pop %v427
        %v430 = vmul.f32 1.0, %v429
        %v431 = vrcp.pop %v428
        %v432 = vmul.f32 1.0, %v431
        %v433 = vmul.f32 %v430, 1.0614054
        %v434 = vmul.f32 %v432, 1.0614054
        %v435 = vadd.f32 %v433, -1.4531521
        %v436 = vadd.f32 %v434, -1.4531521
        %v437 = vmul.f32 %v435, %v430
        %v438 = vmul.f32 %v436, %v432
        %v439 = vadd.f32 %v437, 1.4214138
        %v440 = vadd.f32 %v438, 1.4214138
        %v441 = vmul.f32 %v439, %v430
        %v442 = vmul.f32 %v440, %v432
        %v443 = vadd.f32 %v441, -0.28449672
        %v444 = vadd.f32 %v442, -0.28449672
        %v445 = vmul.f32 %v443, %v430
        %v446 = vmul.f32 %v444, %v432
        %v447 = vadd.f32 %v445, 0.2548296
        %v448 = vadd.f32 %v446, 0.2548296
        %v449 = vmul.f32 %v447, %v430
        %v450 = vmul.f32 %v448, %v432
        %v451 = vsub.f32 0.0, %v423
        %v452 = vsub.f32 0.0, %v424
        %v453 = vmul.f32 %v451, %v423
        %v454 = vmul.f32 %v452, %v424
        %v455 = vmul.f32 %v453, 1.442695
        %v456 = vpow.pop %v455
        %v457 = vmul.f32 %v454, 1.442695
        %v458 = vpow.pop %v457
        %v459 = vmul.f32 %v449, %v456
        %v460 = vmul.f32 %v450, %v458
        %v461 = vsub.f32 1.0, %v459
        %v462 = vsub.f32 1.0, %v460
        %vm463 = vcmp.ge.f32.partialorder %v421, 0.0
        %vm464 = vcmp.ge.f32.partialorder %v422, 0.0
        %v465 = vsub.f32 0.0, %v461
        %v466 = vsub.f32 0.0, %v462
        %v467 = vsel %vm463, %v461, %v465
        %v468 = vsel %vm464, %v462, %v466
        %v469 = vadd.f32 %v467, 1.0
        %v470 = vadd.f32 %v468, 1.0
        %v471 = vmul.f32 %v419, %v469
        %v472 = vmul.f32 %v420, %v470
        %v473 = vlaneseq
        %v474 = vand.u32 %v473, 127
        %v475 = vadd.s32 %v474, 128
        %v476 = vand.u32 %v474, 15
        %v477 = vand.u32 %v475, 15
        %478 = vrot.lane.b32.xlu0 %v471, 17
        %v479 = vpop.permute.xlu0 %478
        %480 = vrot.lane.b32.xlu0 %v472, 17
        %v481 = vpop.permute.xlu0 %480
        %vm482 = vcmp.lt.s32.totalorder %v474, 17
        %v483 = vsel %vm482, %v479, %v481
        %v484 = vsel %vm482, %v481, %v479
        %vm485 = vcmp.ge.s32.totalorder %v474, 16
        %vm486 = vcmp.ge.s32.totalorder %v475, 16
        %vm487 = vcmp.ge.s32.totalorder %v476, 1
        %vm488 = vcmp.ge.s32.totalorder %v477, 1
        %vm489 = vmand %vm485, %vm487
        %vm490 = vmand %vm486, %vm488
        %v491 = vsel %vm489, %v484, 0.0
        %v492 = vsel %vm490, %v483, 0.0
        %493 = vrot.lane.b32.xlu0 %v471, 16
        %v494 = vpop.permute.xlu0 %493
        %495 = vrot.lane.b32.xlu0 %v472, 16
        %v496 = vpop.permute.xlu0 %495
        %vm497 = vcmp.lt.s32.totalorder %v474, 16
        %v498 = vsel %vm497, %v494, %v496
        %v499 = vsel %vm497, %v496, %v494
        %v500 = vsel %vm485, %v499, 0.0
        %v501 = vsel %vm486, %v498, 0.0
        %502 = vrot.lane.b32.xlu0 %v471, 15
        %v503 = vpop.permute.xlu0 %502
        %504 = vrot.lane.b32.xlu0 %v472, 15
        %v505 = vpop.permute.xlu0 %504
        %vm506 = vcmp.lt.s32.totalorder %v474, 15
        %v507 = vsel %vm506, %v503, %v505
        %v508 = vsel %vm506, %v505, %v503
        %vm509 = vcmp.lt.s32.totalorder %v476, 15
        %vm510 = vcmp.lt.s32.totalorder %v477, 15
        %vm511 = vmand %vm485, %vm509
        %vm512 = vmand %vm486, %vm510
        %v513 = vsel %vm511, %v508, 0.0
        %v514 = vsel %vm512, %v507, 0.0
        %515 = vrot.lane.b32.xlu0 %v471, 1
        %v516 = vpop.permute.xlu0 %515
        %517 = vrot.lane.b32.xlu0 %v472, 1
        %v518 = vpop.permute.xlu0 %517
        %vm519 = vcmp.lt.s32.totalorder %v474, 1
        %v520 = vsel %vm519, %v516, %v518
        %v521 = vsel %vm519, %v518, %v516
        %v522 = vsel %vm487, %v521, 0.0
        %v523 = vsel %vm488, %v520, 0.0
        %524 = vrot.lane.b32.xlu0 %v471, 127
        %v525 = vpop.permute.xlu0 %524
        %526 = vrot.lane.b32.xlu0 %v472, 127
        %v527 = vpop.permute.xlu0 %526
        %vm528 = vcmp.lt.s32.totalorder %v474, 127
        %v529 = vsel %vm528, %v525, %v527
        %v530 = vsel %vm528, %v527, %v525
        %v531 = vsel %vm509, %v529, 0.0
        %v532 = vsel %vm510, %v530, 0.0
        %533 = vrot.lane.b32.xlu0 %v471, 113
        %v534 = vpop.permute.xlu0 %533
        %535 = vrot.lane.b32.xlu0 %v472, 113
        %v536 = vpop.permute.xlu0 %535
        %vm537 = vcmp.lt.s32.totalorder %v474, 113
        %v538 = vsel %vm537, %v534, %v536
        %v539 = vsel %vm537, %v536, %v534
        %vm540 = vcmp.lt.s32.totalorder %v474, 240
        %vm541 = vcmp.lt.s32.totalorder %v475, 240
        %vm542 = vmand %vm540, %vm487
        %vm543 = vmand %vm541, %vm488
        %v544 = vsel %vm542, %v538, 0.0
        %v545 = vsel %vm543, %v539, 0.0
        %546 = vrot.lane.b32.xlu0 %v471, 112
        %v547 = vpop.permute.xlu0 %546
        %548 = vrot.lane.b32.xlu0 %v472, 112
        %v549 = vpop.permute.xlu0 %548
        %vm550 = vcmp.lt.s32.totalorder %v474, 112
        %v551 = vsel %vm550, %v547, %v549
        %v552 = vsel %vm550, %v549, %v547
        %v553 = vsel %vm540, %v551, 0.0
        %v554 = vsel %vm541, %v552, 0.0
        %555 = vrot.lane.b32.xlu0 %v471, 111
        %v556 = vpop.permute.xlu0 %555
        %557 = vrot.lane.b32.xlu0 %v472, 111
        %v558 = vpop.permute.xlu0 %557
        %vm559 = vcmp.lt.s32.totalorder %v474, 111
        %v560 = vsel %vm559, %v556, %v558
        %v561 = vsel %vm559, %v558, %v556
        %vm562 = vmand %vm540, %vm509
        %vm563 = vmand %vm541, %vm510
        %v564 = vsel %vm562, %v560, 0.0
        %v565 = vsel %vm563, %v561, 0.0
        %v566 = vpack.c.bf16 %v500, %v491
        %v567 = vpack.c.bf16 %v501, %v492
        %v568 = vpack.c.bf16 %v522, %v513
        %v569 = vpack.c.bf16 %v523, %v514
        %v570 = vpack.c.bf16 %v531, %v471
        %v571 = vpack.c.bf16 %v532, %v472
        %v572 = vpack.c.bf16 %v553, %v544
        %v573 = vpack.c.bf16 %v554, %v545
        %v574 = vpack.c.bf16 %v564, %v564
        %v575 = vpack.c.bf16 %v565, %v565
        %vm576 = vcmask 588800
        %v578 = vsel %vm576, %v284, 0
        %vm580 = vcmask 1043456
        %v582 = vsel %vm580, %v574, 0
        %v585 = vsel %vm580, %v575, 0
        %587 = vmatprep.subr.bf16.mxu0 0
        %588 = vmatpush1.bf16.msra.mxu0 0
        %589 = vmatprep.subr.bf16.mxu0 0
        %590 = vmatpush1.bf16.msra.mxu0 0
        %591 = vmatprep.subr.bf16.mxu0 0
        %592 = vmatpush1.bf16.msra.mxu0 0
        %593 = vmatprep.subr.bf16.mxu0 %v585
        %594 = vmatpush1.bf16.msra.mxu0 %v582
        %595 = vmatprep.subr.bf16.mxu0 %v573
        %596 = vmatpush1.bf16.msra.mxu0 %v572
        %597 = vmatprep.subr.bf16.mxu0 %v571
        %598 = vmatpush1.bf16.msra.mxu0 %v570
        %599 = vmatprep.subr.bf16.mxu0 %v569
        %600 = vmatpush1.bf16.msra.mxu0 %v568
        %601 = vmatprep.subr.bf16.mxu0 %v567
        %602 = vmatpush1.bf16.msra.mxu0 %v566
        %603 = vmatprep.subr.bf16.mxu0 0
        %604 = vmatpush2.bf16.msra.mxu0 0
        %605 = vmatprep.subr.bf16.mxu0 0
        %606 = vmatpush2.bf16.msra.mxu0 0
        %607 = vmatprep.subr.bf16.mxu0 0
        %608 = vmatpush2.bf16.msra.mxu0 0
        %609 = vmatprep.subr.bf16.mxu0 0
        %610 = vmatpush2.bf16.msra.mxu0 0
        %611 = vmatprep.subr.bf16.mxu0 0
        %612 = vmatpush2.bf16.msra.mxu0 0
        %613 = vmatprep.subr.bf16.mxu0 0
        %614 = vmatpush2.bf16.msra.mxu0 0
        %615 = vmatprep.subr.bf16.mxu0 0
        %616 = vmatpush2.bf16.msra.mxu0 0
        %617 = vmatprep.subr.bf16.mxu0 0
        %618 = vmatpush2.bf16.msra.mxu0 0
        %619 = vmatprep.mubr.bf16.mxu0 0
        %620 = vmatmul.mubr.bf16.gmra.mxu0 %v578
        %v621 = vpop.f32.mrf.mxu0
        %v622 = vadd.f32 0.0, %v621
        %v623 = vpop.f32.mrf.mxu0
        %v624 = vadd.f32 0.0, %v623
        %v625 = vpop.f32.mrf.mxu0
        %v626 = vpop.f32.mrf.mxu0
        %627 = vdwg.mxu0
        %v628 = vld [vmem:[%s5] sm:$0xff]
        %v629 = vld [vmem:[%s6] sm:$0xff]
        %v630 = vadd.f32 %v622, %v624
        %631 = vadd.xlane.f32.xlu0 %v630
        %v632 = vpop.xlane.xlu0 %631
        %v633 = vrot.slane %v632, 4
        %v634 = vadd.f32 %v632, %v633
        %v635 = vrot.slane %v634, 2
        %v636 = vadd.f32 %v634, %v635
        %v637 = vrot.slane %v636, 1
        %v638 = vadd.f32 %v636, %v637
        %s639 = vtos %v638
        %v640 = vmul.f32 %v622, %v622
        %v641 = vmul.f32 %v624, %v624
        %v642 = vadd.f32 %v640, %v641
        %643 = vadd.xlane.f32.xlu0 %v642
        %v644 = vpop.xlane.xlu0 %643
        %v645 = vrot.slane %v644, 4
        %v646 = vadd.f32 %v644, %v645
        %v647 = vrot.slane %v646, 2
        %v648 = vadd.f32 %v646, %v647
        %v649 = vrot.slane %v648, 1
        %v650 = vadd.f32 %v648, %v649
        %s651 = vtos %v650
        %v652 = vrcp.pop 2048.0
        %s653 = vtos %v652
        %s654 = smul.f32 %s639, %s653
        %v655 = vrcp.pop 2048.0
        %s656 = vtos %v655
        %s657 = smul.f32 %s651, %s656
        %s658 = smul.f32 %s654, %s654
        %s659 = ssub.f32 %s657, %s658
        %s660 = smax.f32 %s659, 0.0
        %v661 = vstv %s654
        %v662 = vsub.f32 %v622, %v661
        %v663 = vsub.f32 %v624, %v661
        %s664 = sadd.f32 %s660, 1e-05
        %v665 = vstv %s664
        %v666 = vrsqrt.pop %v665
        %s667 = vtos %v666
        %v668 = vstv %s667
        %v669 = vmul.f32 %v662, %v668
        %v670 = vmul.f32 %v663, %v668
        %672 = vset.pattern.permute.xlu0 0
        %673 = vperm.xlu0 %672, %v628
        %v674 = vpop.permute.xlu0 %673
        %v676 = vmul.f32 %v669, %v674
        %v677 = vmul.f32 %v670, %v674
        %679 = vset.pattern.permute.xlu0 0
        %680 = vperm.xlu0 %679, %v629
        %v681 = vpop.permute.xlu0 %680
        %v683 = vadd.f32 %v676, %v681
        %v684 = vadd.f32 %v677, %v681
        %685 = vst [vmem:[%s271] sm:$0xff] %v683
        %686 = vst [vmem:[%s271 + $0x8] sm:$0xff] %v684
        %s687 = sand.u32 %s181, 1
        %s688 = scalar_lea.sflag [#allocation3], %s687
        %s689 = sand.u32 %s181, 1
        %s690 = smul.addr %s689, 16
        %s691 = scalar_lea.vmem [#allocation2], %s690
        // Predicated region
        $region49: #{tpu_custom_call.1} parent=47 // pred_check
          %p692 = pneg %p191
        $region50: #{tpu_custom_call.1} parent=47 // pred_check_branch
          %694 = sbr.rel (%p692) target = $region52
        $region51: #{tpu_custom_call.1} parent=47 // pred_region
          %s696 = ssub.s32 256, 256
          %697 = vsyncadd %s688, %s696
          %s698 = smul.addr %s21, 2
          %s699 = smul.addr %s698, 128
          %s700 = scalar_lea.hbm %s7, %s699
          %s702 = sshll.u32 %s691, 4
          %s703 = int_to_ptr.vmem [resolvable:$true] %s702
          %705 = dma.vmem_to_hbm [thread:$0]  %s703, 256, %s700, %s688
        $region52: #{tpu_custom_call.1} parent=47 // pred_fallthru
          _
      $region48: #{tpu_custom_call.1} parent=5 // pred_fallthru
        _
      %p706 = scmp.le.s32.totalorder 2, %s16
      // Predicated region
      $region53: #{tpu_custom_call.1} parent=5 // pred_check
        %p707 = pneg %p706
      $region54: #{tpu_custom_call.1} parent=5 // pred_check_branch
        %709 = sbr.rel (%p707) target = $region56
      $region55: #{tpu_custom_call.1} parent=5 // pred_region
        %s710 = ssub.s32 %s16, 2
        // Predicated region
        $region57: #{tpu_custom_call.1} parent=55 // pred_check
          %p711 = pneg %p197
        $region58: #{tpu_custom_call.1} parent=55 // pred_check_branch
          %713 = sbr.rel (%p711) target = $region60
        $region59: #{tpu_custom_call.1} parent=55 // pred_region
          %s714 = sand.u32 %s182, 1
          %s715 = scalar_lea.sflag [#allocation3], %s714
          %s716 = sand.u32 %s182, 1
          %s717 = smul.addr %s716, 16
          %s718 = scalar_lea.vmem [#allocation2], %s717
          %719 = dma.done %s715, 256
        $region60: #{tpu_custom_call.1} parent=55 // pred_fallthru
          _
      $region56: #{tpu_custom_call.1} parent=5 // pred_fallthru
        _
    $region6: #{tpu_custom_call.1} parent=1 // loop_footer
      %s20 = sadd.s32 1, %s16
    $region7: #{tpu_custom_call.1} parent=1 // loop_footer_branch
      %15 = sbr.rel target = $region3
    $region8: #{tpu_custom_call.1} parent=1 // loop_exit
      _
    %720 = vsyncpa [#allocation3], 1
    %s721 = scalar_lea.sflag [#allocation3], 1
    %722 = vsyncpa %s721, 1

</llo_original>
